<compile_context>
chip_gen: v7x
topology: tpu7x:2x2x1
jax: 0.10.0
libtpu: 0.0.40
codegen_flags: <defaults>
</compile_context>

<pallas_src>
import functools

import jax
import jax.numpy as jnp
from jax.experimental import pallas as pl
from jax.experimental.pallas import tpu as pltpu


def _round_up(x, m):
    return (x + m - 1) // m * m


def _tpu_config():
    """Per-generation tiling / VMEM-cap defaults (conservative on unknown HW)."""
    kind = ""
    try:
        kind = (getattr(jax.devices()[0], "device_kind", "") or "").lower()
    except Exception:
        pass
    if "v7" in kind:
        # 64 MiB physical VMEM per TC; 2 TCs -> want >= 2 row tiles.
        return dict(vmem_cap=52 << 20, min_row_tiles=2, rows16=512, rows32=384)
    if "v6" in kind:
        # 128 MiB physical; big row tiles to cross the ~650 flop/byte ridge.
        return dict(vmem_cap=104 << 20, min_row_tiles=1, rows16=1024, rows32=640)
    if "v5" in kind:
        return dict(vmem_cap=104 << 20, min_row_tiles=1, rows16=512, rows32=384)
    return dict(vmem_cap=64 << 20, min_row_tiles=1, rows16=512, rows32=256)


# --------------------------------------------------------------------------- #
# Kernels
# --------------------------------------------------------------------------- #
def _ffn_ln_resident_kernel(x_ref, w1_ref, w2_ref, g_ref, b_ref, o_ref, *, eps):
    # Whole W1/W2 resident in VMEM; one fused pass per row tile.
    x = x_ref[...]
    h = jnp.dot(x, w1_ref[...], preferred_element_type=jnp.float32)
    h = jnp.maximum(h, 0.0)
    y = jnp.dot(h.astype(w2_ref.dtype), w2_ref[...],
                preferred_element_type=jnp.float32)
    z = y + x.astype(jnp.float32)
    mean = jnp.mean(z, axis=-1, keepdims=True)
    c = z - mean
    var = jnp.mean(c * c, axis=-1, keepdims=True)
    out = (c * jax.lax.rsqrt(var + eps) * g_ref[...].astype(jnp.float32)
           + b_ref[...].astype(jnp.float32))
    o_ref[...] = out.astype(o_ref.dtype)


def _ffn_ln_ktiled_kernel(x_ref, w1_ref, w2_ref, g_ref, b_ref, o_ref, acc_ref,
                          *, eps):
    # d_ff tiled on the inner ("arbitrary") grid axis; f32 accumulator scratch.
    k = pl.program_id(1)

    @pl.when(k == 0)
    def _():
        acc_ref[...] = jnp.zeros_like(acc_ref)

    h = jnp.dot(x_ref[...], w1_ref[...], preferred_element_type=jnp.float32)
    h = jnp.maximum(h, 0.0)
    acc_ref[...] += jnp.dot(h.astype(w2_ref.dtype), w2_ref[...],
                            preferred_element_type=jnp.float32)

    @pl.when(k == pl.num_programs(1) - 1)
    def _():
        z = acc_ref[...] + x_ref[...].astype(jnp.float32)
        mean = jnp.mean(z, axis=-1, keepdims=True)
        c = z - mean
        var = jnp.mean(c * c, axis=-1, keepdims=True)
        out = (c * jax.lax.rsqrt(var + eps) * g_ref[...].astype(jnp.float32)
               + b_ref[...].astype(jnp.float32))
        o_ref[...] = out.astype(o_ref.dtype)


# --------------------------------------------------------------------------- #
# Wrapper
# --------------------------------------------------------------------------- #
def poswise_ffn(x, w1, w2, gamma, beta, *, eps=1e-5,
                block_rows=None, block_ff=512, weights_dtype=None):
    """x: [B, S, d_model]; w1: [d_model, d_ff]; w2: [d_ff, d_model]."""
    B, S, D = x.shape
    d_ff = w1.shape[1]
    rows = B * S

    # Optional bf16 weight pre-cast for MXU-native rates (f32 accumulation and
    # f32 epilogue are kept).  Off by default to match the f32 reference here.
    if weights_dtype is not None:
        w1 = w1.astype(weights_dtype)
        w2 = w2.astype(weights_dtype)

    x_isz = jnp.dtype(x.dtype).itemsize
    w_isz = jnp.dtype(w1.dtype).itemsize

    cfg = _tpu_config()
    vmem_cap = cfg["vmem_cap"]
    row_align = 8 if x_isz >= 4 else 16
    if block_rows is None:
        block_rows = cfg["rows16"] if x_isz < 4 else cfg["rows32"]

    rows_a = _round_up(rows, row_align)

    # ---- Path decision: resident weights vs. k-tiled d_ff ------------------
    # Budget conservatively: 2 buffers per weight BlockSpec (even with a
    # constant index map), plus the Mosaic-internal FC1 intermediate (f32 h and
    # its cast) and f32 LayerNorm / residual temporaries.
    small_const = 4 * D * 4 + (64 << 10)            # gamma/beta tiles + slack
    resident_fixed = 2 * 2 * D * d_ff * w_isz + small_const
    resident_per_row = (4 * D * x_isz               # x + out, double-buffered
                        + d_ff * 4                  # f32 FC1 intermediate
                        + d_ff * w_isz              # cast of h for FC2
                        + 2 * D * 4)                # LN temporaries
    resident_max_tm = (vmem_cap - resident_fixed) // resident_per_row
    use_resident = resident_max_tm >= min(256, rows_a)

    d_ff_p = d_ff
    if use_resident:
        tk = d_ff
        grid_k = 1
        max_tm = resident_max_tm
    else:
        # Pad d_ff with inert zero columns/rows so a lane-aligned (>=256 when
        # possible) tile divides it and the k-axis pipeline stays intact.
        d_ff_p = _round_up(d_ff, 128)
        tk = None
        for cand in (block_ff, 512, 384, 256):
            if cand % 128 == 0 and cand <= d_ff_p and d_ff_p % cand == 0:
                tk = cand
                break
        if tk is None:
            d_ff_p = _round_up(d_ff, 256)
            tk = 512 if (d_ff_p >= 512 and d_ff_p % 512 == 0) else min(256, d_ff_p)
        grid_k = d_ff_p // tk
        ktiled_fixed = 2 * 2 * D * tk * w_isz + small_const
        ktiled_per_row = (4 * D * x_isz
                          + D * 4                   # f32 accumulator scratch
                          + tk * 4                  # f32 FC1 intermediate
                          + tk * w_isz              # cast of h for FC2
                          + 2 * D * 4)              # LN temporaries
        max_tm = max((vmem_cap - ktiled_fixed) // ktiled_per_row, row_align)

    # ---- Row tile (tm) selection -------------------------------------------
    target_tm = min(block_rows, max_tm, rows_a)
    target_tm = max(row_align, (target_tm // row_align) * row_align)
    if cfg["min_row_tiles"] > 1:
        cap = _round_up(-(-rows_a // cfg["min_row_tiles"]), row_align)
        target_tm = min(target_tm, max(row_align, cap))

    # Prefer a tm that divides the aligned row count (avoids a large jnp.pad
    # round-trip of the activations); otherwise pad up to a tm multiple.
    tm = None
    t = target_tm
    while t >= row_align:
        if rows_a % t == 0:
            tm = t
            break
        t -= row_align
    if tm is None or tm * 4 < target_tm:
        tm = target_tm
        rows_p = _round_up(rows_a, tm)
    else:
        rows_p = rows_a
    n_row_tiles = rows_p // tm

    # ---- Host-side reshapes / padding ---------------------------------------
    x2 = x.reshape(rows, D)
    if rows_p != rows:
        x2 = jnp.pad(x2, ((0, rows_p - rows), (0, 0)))
    if d_ff_p != d_ff:
        # Zero W1 columns / W2 rows are inert through ReLU and the sum.
        w1 = jnp.pad(w1, ((0, 0), (0, d_ff_p - d_ff)))
        w2 = jnp.pad(w2, ((0, d_ff_p - d_ff), (0, 0)))
    g2 = gamma.reshape(1, D)
    b2 = beta.reshape(1, D)

    # ---- VMEM limit and cost estimate (schedule-accurate) -------------------
    if use_resident:
        used = resident_fixed + tm * resident_per_row
    else:
        used = ktiled_fixed + tm * ktiled_per_row
    vmem_limit = int(min(max(used + used // 4 + (4 << 20), 16 << 20), vmem_cap))

    weight_reads = 1 if use_resident else n_row_tiles
    cost = pl.CostEstimate(
        flops=4 * rows_p * D * d_ff_p + 10 * rows_p * D,
        transcendentals=rows_p,
        bytes_accessed=(2 * rows_p * D * x_isz
                        + weight_reads * 2 * D * d_ff_p * w_isz
                        + 2 * D * 4),
    )

    # ---- pallas_call ---------------------------------------------------------
    if use_resident:
        kernel = functools.partial(_ffn_ln_resident_kernel, eps=eps)
        grid = (n_row_tiles,)
        in_specs = [
            pl.BlockSpec((tm, D), lambda i: (i, 0)),        # x row tile
            pl.BlockSpec((D, d_ff_p), lambda i: (0, 0)),    # W1 (resident)
            pl.BlockSpec((d_ff_p, D), lambda i: (0, 0)),    # W2 (resident)
            pl.BlockSpec((1, D), lambda i: (0, 0)),         # gamma
            pl.BlockSpec((1, D), lambda i: (0, 0)),         # beta
        ]
        out_specs = pl.BlockSpec((tm, D), lambda i: (i, 0))
        scratch_shapes = []
        dims = ("parallel",)
    else:
        kernel = functools.partial(_ffn_ln_ktiled_kernel, eps=eps)
        grid = (n_row_tiles, grid_k)
        in_specs = [
            pl.BlockSpec((tm, D), lambda i, k: (i, 0)),     # x row tile
            pl.BlockSpec((D, tk), lambda i, k: (0, k)),     # W1 column tile
            pl.BlockSpec((tk, D), lambda i, k: (k, 0)),     # W2 row tile
            pl.BlockSpec((1, D), lambda i, k: (0, 0)),      # gamma
            pl.BlockSpec((1, D), lambda i, k: (0, 0)),      # beta
        ]
        out_specs = pl.BlockSpec((tm, D), lambda i, k: (i, 0))
        scratch_shapes = [pltpu.VMEM((tm, D), jnp.float32)]
        dims = ("parallel", "arbitrary")

    out2 = pl.pallas_call(
        kernel,
        out_shape=jax.ShapeDtypeStruct((rows_p, D), x.dtype),
        grid_spec=pltpu.PrefetchScalarGridSpec(
            num_scalar_prefetch=0,
            grid=grid,
            in_specs=in_specs,
            out_specs=out_specs,
            scratch_shapes=scratch_shapes,
        ),
        compiler_params=pltpu.CompilerParams(
            dimension_semantics=dims,
            vmem_limit_bytes=vmem_limit,
        ),
        cost_estimate=cost,
    )(x2, w1, w2, g2, b2)

    if rows_p != rows:
        out2 = out2[:rows]
    return out2.reshape(B, S, D)


def _reference(x, w1, w2, gamma, beta, eps=1e-5):
    h = jnp.maximum(jnp.einsum("bsd,df->bsf", x, w1), 0.0)
    y = jnp.einsum("bsf,fd->bsd", h, w2)
    z = y + x
    mean = jnp.mean(z, axis=-1, keepdims=True)
    var = jnp.mean((z - mean) ** 2, axis=-1, keepdims=True)
    return (z - mean) * jax.lax.rsqrt(var + eps) * gamma + beta


if __name__ == "__main__":
    # Small shapes consistent with the module: [batch, seq_len, d_model]
    B, S, D, D_FF = 2, 8, 128, 256

    key = jax.random.PRNGKey(0)
    kx, k1, k2 = jax.random.split(key, 3)

    x = jax.random.normal(kx, (B, S, D), dtype=jnp.float32)
    # Deterministic synthetic parameters (nn.Linear weights, no bias).
    w1 = jax.random.normal(k1, (D, D_FF), dtype=jnp.float32) * (1.0 / D ** 0.5)
    w2 = jax.random.normal(k2, (D_FF, D), dtype=jnp.float32) * (1.0 / D_FF ** 0.5)
    # nn.LayerNorm default init: gamma = 1, beta = 0.
    gamma = jnp.ones((D,), dtype=jnp.float32)
    beta = jnp.zeros((D,), dtype=jnp.float32)

    out = poswise_ffn(x, w1, w2, gamma, beta)
    out = jax.block_until_ready(out)

    ref = _reference(x, w1, w2, gamma, beta)
    assert out.shape == (B, S, D)
    assert jnp.allclose(out, ref, atol=1e-4, rtol=1e-4)

    print("KERNEL_OK")
</pallas_src>

<mosaic_0001>
module attributes {stable_mosaic.version = 11 : i64} {
  func.func @_ffn_ln_resident_kernel(%arg0: i32, %arg1: memref<16x128xf32, #tpu.memory_space<vmem>>, %arg2: memref<128x256xf32, #tpu.memory_space<vmem>>, %arg3: memref<256x128xf32, #tpu.memory_space<vmem>>, %arg4: memref<1x128xf32, #tpu.memory_space<vmem>>, %arg5: memref<1x128xf32, #tpu.memory_space<vmem>>, %arg6: memref<16x128xf32, #tpu.memory_space<vmem>>) attributes {dimension_semantics = [#tpu.dimension_semantics<parallel>], iteration_bounds = array<i64: 1>, scalar_prefetch = 0 : i64, scratch_operands = 0 : i64, tpu.core_type = #tpu.core_type<tc>, window_params = [{transform_indices = @transform_0, window_bounds = array<i64: 16, 128>}, {pipeline_mode = #tpu.pipeline_mode<synchronous>, transform_indices = @transform_1, window_bounds = array<i64: 128, 256>}, {pipeline_mode = #tpu.pipeline_mode<synchronous>, transform_indices = @transform_2, window_bounds = array<i64: 256, 128>}, {pipeline_mode = #tpu.pipeline_mode<synchronous>, transform_indices = @transform_3, window_bounds = array<i64: 1, 128>}, {pipeline_mode = #tpu.pipeline_mode<synchronous>, transform_indices = @transform_4, window_bounds = array<i64: 1, 128>}, {transform_indices = @transform_5, window_bounds = array<i64: 16, 128>}]} {
    %c0 = arith.constant 0 : index
    %c0_0 = arith.constant 0 : index
    %0 = vector.load %arg1[%c0, %c0_0] : memref<16x128xf32, #tpu.memory_space<vmem>>, vector<16x128xf32>
    %c0_1 = arith.constant 0 : index
    %c0_2 = arith.constant 0 : index
    %1 = vector.load %arg2[%c0_1, %c0_2] : memref<128x256xf32, #tpu.memory_space<vmem>>, vector<128x256xf32>
    %cst = arith.constant dense<0.000000e+00> : vector<16x256xf32>
    %2 = tpu.matmul %0, %1, %cst {dimension_numbers = #tpu.dot_dimension_numbers<[1], [0], [0], [1], [0, 0, 1, 1], [], []>} : vector<16x128xf32>, vector<128x256xf32>, vector<16x256xf32> -> vector<16x256xf32>
    %cst_3 = arith.constant 0.000000e+00 : f32
    %3 = vector.broadcast %cst_3 : f32 to vector<16x256xf32>
    %4 = arith.maximumf %2, %3 : vector<16x256xf32>
    %c0_4 = arith.constant 0 : index
    %c0_5 = arith.constant 0 : index
    %5 = vector.load %arg3[%c0_4, %c0_5] : memref<256x128xf32, #tpu.memory_space<vmem>>, vector<256x128xf32>
    %cst_6 = arith.constant dense<0.000000e+00> : vector<16x128xf32>
    %6 = tpu.matmul %4, %5, %cst_6 {dimension_numbers = #tpu.dot_dimension_numbers<[1], [0], [0], [1], [0, 0, 1, 1], [], []>} : vector<16x256xf32>, vector<256x128xf32>, vector<16x128xf32> -> vector<16x128xf32>
    %7 = arith.addf %6, %0 : vector<16x128xf32>
    %cst_7 = arith.constant dense<0.000000e+00> : vector<16xf32>
    %8 = vector.multi_reduction <add>, %7, %cst_7 [1] : vector<16x128xf32> to vector<16xf32>
    %9 = vector.shape_cast %8 : vector<16xf32> to vector<16x1xf32>
    %cst_8 = arith.constant 1.280000e+02 : f32
    %10 = vector.broadcast %cst_8 : f32 to vector<16x1xf32>
    %11 = arith.divf %9, %10 : vector<16x1xf32>
    %12 = vector.broadcast %11 : vector<16x1xf32> to vector<16x128xf32>
    %13 = arith.subf %7, %12 : vector<16x128xf32>
    %14 = arith.mulf %13, %13 : vector<16x128xf32>
    %cst_9 = arith.constant dense<0.000000e+00> : vector<16xf32>
    %15 = vector.multi_reduction <add>, %14, %cst_9 [1] : vector<16x128xf32> to vector<16xf32>
    %16 = vector.shape_cast %15 : vector<16xf32> to vector<16x1xf32>
    %cst_10 = arith.constant 1.280000e+02 : f32
    %17 = vector.broadcast %cst_10 : f32 to vector<16x1xf32>
    %18 = arith.divf %16, %17 : vector<16x1xf32>
    %cst_11 = arith.constant 9.99999974E-6 : f32
    %19 = vector.broadcast %cst_11 : f32 to vector<16x1xf32>
    %20 = arith.addf %18, %19 : vector<16x1xf32>
    %21 = math.rsqrt %20 : vector<16x1xf32>
    %22 = vector.broadcast %21 : vector<16x1xf32> to vector<16x128xf32>
    %23 = arith.mulf %13, %22 : vector<16x128xf32>
    %c0_12 = arith.constant 0 : index
    %c0_13 = arith.constant 0 : index
    %24 = vector.load %arg4[%c0_12, %c0_13] : memref<1x128xf32, #tpu.memory_space<vmem>>, vector<1x128xf32>
    %25 = vector.broadcast %24 : vector<1x128xf32> to vector<16x128xf32>
    %26 = arith.mulf %23, %25 : vector<16x128xf32>
    %c0_14 = arith.constant 0 : index
    %c0_15 = arith.constant 0 : index
    %27 = vector.load %arg5[%c0_14, %c0_15] : memref<1x128xf32, #tpu.memory_space<vmem>>, vector<1x128xf32>
    %28 = vector.broadcast %27 : vector<1x128xf32> to vector<16x128xf32>
    %29 = arith.addf %26, %28 : vector<16x128xf32>
    %c0_16 = arith.constant 0 : index
    %c0_17 = arith.constant 0 : index
    %30 = vector.load %arg6[%c0_16, %c0_17] : memref<16x128xf32, #tpu.memory_space<vmem>>, vector<16x128xf32>
    tpu.vector_store %arg6[%c0_16, %c0_17], %29 {strides = array<i32>} : memref<16x128xf32, #tpu.memory_space<vmem>>, vector<16x128xf32>,
    return
  }
  func.func @transform_0(%arg0: i32) -> (i32, i32) {
    %c0_i32 = arith.constant 0 : i32
    %c0_i32_0 = arith.constant 0 : i32
    return %arg0, %c0_i32 : i32, i32
  }
  func.func @transform_1(%arg0: i32) -> (i32, i32) {
    %c0_i32 = arith.constant 0 : i32
    %c0_i32_0 = arith.constant 0 : i32
    %c0_i32_1 = arith.constant 0 : i32
    return %c0_i32, %c0_i32_0 : i32, i32
  }
  func.func @transform_2(%arg0: i32) -> (i32, i32) {
    %c0_i32 = arith.constant 0 : i32
    %c0_i32_0 = arith.constant 0 : i32
    %c0_i32_1 = arith.constant 0 : i32
    return %c0_i32, %c0_i32_0 : i32, i32
  }
  func.func @transform_3(%arg0: i32) -> (i32, i32) {
    %c0_i32 = arith.constant 0 : i32
    %c0_i32_0 = arith.constant 0 : i32
    %c0_i32_1 = arith.constant 0 : i32
    return %c0_i32, %c0_i32_0 : i32, i32
  }
  func.func @transform_4(%arg0: i32) -> (i32, i32) {
    %c0_i32 = arith.constant 0 : i32
    %c0_i32_0 = arith.constant 0 : i32
    %c0_i32_1 = arith.constant 0 : i32
    return %c0_i32, %c0_i32_0 : i32, i32
  }
  func.func @transform_5(%arg0: i32) -> (i32, i32) {
    %c0_i32 = arith.constant 0 : i32
    %c0_i32_0 = arith.constant 0 : i32
    return %arg0, %c0_i32 : i32, i32
  }
}

</mosaic_0001>

<llo_original>
// kernel: tpu_custom_call.1
$region0: #{tpu_custom_call.1}
  #allocation0 [shape = 'u32[]', space=smem, size = 0x4, offset = 0x4, fixed_abs, tag = 'smem constant byte address 0x4 - core index']
  #allocation1 [shape = 'u32[144,128]{1,0:T(1,128)}', space=vmem, size = 0x12000, scoped, tag = 'internal scratch']
  %s0 = inlined_call_operand.hbm [shape: f32[16,128], index: 0, kind: input, shape index: {}]
  %s1 = inlined_call_operand.hbm [shape: f32[128,256], index: 1, kind: input, shape index: {}]
  %s2 = inlined_call_operand.hbm [shape: f32[256,128], index: 2, kind: input, shape index: {}]
  %s3 = inlined_call_operand.vmem [shape: f32[1,128], index: 3, kind: input, shape index: {}]
  %s4 = inlined_call_operand.vmem [shape: f32[1,128], index: 4, kind: input, shape index: {}]
  %s5 = inlined_call_operand.hbm [shape: f32[16,128], index: 5, kind: output, shape index: {}]
  %s6 = sld [smem:[#allocation0]]
  $region42: #{tpu_custom_call.1} parent=0
    _
  %s8 = ssub.s32 1, %s6
  %s9 = scalar_select 0, %s8, %s6
  $region1: #{tpu_custom_call.1} parent=0
    #allocation2 [shape = 'u8[8192]{0}', space=vmem, size = 0x2000, scoped, tag = 'input window, operand 0, single buffered']
    #allocation3 [shape = 's32[1]{0}', space=sflag, size = 0x4, scoped, tag = 'scoped memory for tpu_custom_call.1']
    #allocation4 [shape = 's32[1]{0}', space=sflag, size = 0x4, scoped, tag = 'scoped memory for tpu_custom_call.1']
    #allocation5 [shape = 'u8[131072]{0}', space=vmem, size = 0x20000, scoped, tag = 'input window, operand 1, single buffered']
    #allocation6 [shape = 's32[1]{0}', space=sflag, size = 0x4, scoped, tag = 'scoped memory for tpu_custom_call.1']
    #allocation7 [shape = 'u8[131072]{0}', space=vmem, size = 0x20000, scoped, tag = 'input window, operand 2, single buffered']
    #allocation8 [shape = 'u8[8192]{0}', space=vmem, size = 0x2000, scoped, tag = 'output window, operand 0, single buffered']
    %10 = vsyncpa [#allocation3], 0
    %11 = vsyncpa [#allocation6], 0
    %12 = vsyncpa [#allocation4], 0
    // Predicated region
    $region2: #{tpu_custom_call.1} parent=1 // pred_check
      _
    $region3: #{tpu_custom_call.1} parent=1 // pred_check_branch
      %14 = sbr.rel (0) target = $region5
    $region4: #{tpu_custom_call.1} parent=1 // pred_region
      %s16 = ssub.s32 256, 256
      %17 = vsyncadd [#allocation3], %s16
      %s18 = sshll.u32 [#allocation2], 4
      %s19 = int_to_ptr.vmem [resolvable:$true] %s18
      %24 = dma.hbm_to_vmem [thread:$0]  %s0, 256, %s19, [#allocation3], 128, 128, 8
    $region5: #{tpu_custom_call.1} parent=1 // pred_fallthru
      _
    // Predicated region
    $region6: #{tpu_custom_call.1} parent=1 // pred_check
      _
    $region7: #{tpu_custom_call.1} parent=1 // pred_check_branch
      %26 = sbr.rel (0) target = $region9
    $region8: #{tpu_custom_call.1} parent=1 // pred_region
      %s28 = ssub.s32 4096, 4096
      %29 = vsyncadd [#allocation6], %s28
      %s30 = sshll.u32 [#allocation5], 4
      %s31 = int_to_ptr.vmem [resolvable:$true] %s30
      %36 = dma.hbm_to_vmem [thread:$0]  %s1, 4096, %s31, [#allocation6], 256, 256, 16
    $region9: #{tpu_custom_call.1} parent=1 // pred_fallthru
      _
    // Predicated region
    $region10: #{tpu_custom_call.1} parent=1 // pred_check
      _
    $region11: #{tpu_custom_call.1} parent=1 // pred_check_branch
      %38 = sbr.rel (0) target = $region13
    $region12: #{tpu_custom_call.1} parent=1 // pred_region
      %s40 = ssub.s32 4096, 4096
      %41 = vsyncadd [#allocation6], %s40
      %s42 = sshll.u32 [#allocation7], 4
      %s43 = int_to_ptr.vmem [resolvable:$true] %s42
      %48 = dma.hbm_to_vmem [thread:$0]  %s2, 4096, %s43, [#allocation6], 128, 128, 8
    $region13: #{tpu_custom_call.1} parent=1 // pred_fallthru
      _
    // Predicated region
    $region14: #{tpu_custom_call.1} parent=1 // pred_check
      _
    $region15: #{tpu_custom_call.1} parent=1 // pred_check_branch
      %50 = sbr.rel (0) target = $region17
    $region16: #{tpu_custom_call.1} parent=1 // pred_region
      _
    $region17: #{tpu_custom_call.1} parent=1 // pred_fallthru
      _
    // Predicated region
    $region18: #{tpu_custom_call.1} parent=1 // pred_check
      _
    $region19: #{tpu_custom_call.1} parent=1 // pred_check_branch
      %52 = sbr.rel (0) target = $region21
    $region20: #{tpu_custom_call.1} parent=1 // pred_region
      _
    $region21: #{tpu_custom_call.1} parent=1 // pred_fallthru
      _
    // Predicated region
    $region22: #{tpu_custom_call.1} parent=1 // pred_check
      _
    $region23: #{tpu_custom_call.1} parent=1 // pred_check_branch
      %54 = sbr.rel (0) target = $region25
    $region24: #{tpu_custom_call.1} parent=1 // pred_region
      %55 = dma.done [#allocation3], 256
    $region25: #{tpu_custom_call.1} parent=1 // pred_fallthru
      _
    // Predicated region
    $region26: #{tpu_custom_call.1} parent=1 // pred_check
      _
    $region27: #{tpu_custom_call.1} parent=1 // pred_check_branch
      %57 = sbr.rel (0) target = $region29
    $region28: #{tpu_custom_call.1} parent=1 // pred_region
      %58 = dma.done [#allocation6], 4096
    $region29: #{tpu_custom_call.1} parent=1 // pred_fallthru
      _
    // Predicated region
    $region30: #{tpu_custom_call.1} parent=1 // pred_check
      _
    $region31: #{tpu_custom_call.1} parent=1 // pred_check_branch
      %60 = sbr.rel (0) target = $region33
    $region32: #{tpu_custom_call.1} parent=1 // pred_region
      %61 = dma.done [#allocation6], 4096
    $region33: #{tpu_custom_call.1} parent=1 // pred_fallthru
      _
    %v62 = vld [vmem:[#allocation2] sm:$0xff]
    %v63 = vld [vmem:[#allocation2 + $0x8] sm:$0xff]
    %v64 = vld [vmem:[#allocation5] sm:$0xff]
    %v65 = vld [vmem:[#allocation5 + $0x8] sm:$0xff]
    %v66 = vld [vmem:[#allocation5 + $0x10] sm:$0xff]
    %v67 = vld [vmem:[#allocation5 + $0x18] sm:$0xff]
    %v68 = vld [vmem:[#allocation5 + $0x20] sm:$0xff]
    %v69 = vld [vmem:[#allocation5 + $0x28] sm:$0xff]
    %v70 = vld [vmem:[#allocation5 + $0x30] sm:$0xff]
    %v71 = vld [vmem:[#allocation5 + $0x38] sm:$0xff]
    %v72 = vld [vmem:[#allocation5 + $0x40] sm:$0xff]
    %v73 = vld [vmem:[#allocation5 + $0x48] sm:$0xff]
    %v74 = vld [vmem:[#allocation5 + $0x50] sm:$0xff]
    %v75 = vld [vmem:[#allocation5 + $0x58] sm:$0xff]
    %v76 = vld [vmem:[#allocation5 + $0x60] sm:$0xff]
    %v77 = vld [vmem:[#allocation5 + $0x68] sm:$0xff]
    %v78 = vld [vmem:[#allocation5 + $0x70] sm:$0xff]
    %v79 = vld [vmem:[#allocation5 + $0x78] sm:$0xff]
    %v80 = vld [vmem:[#allocation5 + $0x80] sm:$0xff]
    %v81 = vld [vmem:[#allocation5 + $0x88] sm:$0xff]
    %v82 = vld [vmem:[#allocation5 + $0x90] sm:$0xff]
    %v83 = vld [vmem:[#allocation5 + $0x98] sm:$0xff]
    %v84 = vld [vmem:[#allocation5 + $0xa0] sm:$0xff]
    %v85 = vld [vmem:[#allocation5 + $0xa8] sm:$0xff]
    %v86 = vld [vmem:[#allocation5 + $0xb0] sm:$0xff]
    %v87 = vld [vmem:[#allocation5 + $0xb8] sm:$0xff]
    %v88 = vld [vmem:[#allocation5 + $0xc0] sm:$0xff]
    %v89 = vld [vmem:[#allocation5 + $0xc8] sm:$0xff]
    %v90 = vld [vmem:[#allocation5 + $0xd0] sm:$0xff]
    %v91 = vld [vmem:[#allocation5 + $0xd8] sm:$0xff]
    %v92 = vld [vmem:[#allocation5 + $0xe0] sm:$0xff]
    %v93 = vld [vmem:[#allocation5 + $0xe8] sm:$0xff]
    %v94 = vld [vmem:[#allocation5 + $0xf0] sm:$0xff]
    %v95 = vld [vmem:[#allocation5 + $0xf8] sm:$0xff]
    %96 = vmatprep.subr.mxu0 %v65
    %97 = vmatpush1.msra.mxu0 %v64
    %98 = vmatprep.subr.mxu0 %v67
    %99 = vmatpush1.msra.mxu0 %v66
    %100 = vmatprep.subr.mxu0 %v69
    %101 = vmatpush1.msra.mxu0 %v68
    %102 = vmatprep.subr.mxu0 %v71
    %103 = vmatpush1.msra.mxu0 %v70
    %104 = vmatprep.subr.mxu0 %v73
    %105 = vmatpush1.msra.mxu0 %v72
    %106 = vmatprep.subr.mxu0 %v75
    %107 = vmatpush1.msra.mxu0 %v74
    %108 = vmatprep.subr.mxu0 %v77
    %109 = vmatpush1.msra.mxu0 %v76
    %110 = vmatprep.subr.mxu0 %v79
    %111 = vmatpush1.msra.mxu0 %v78
    %112 = vmatprep.subr.mxu0 %v81
    %113 = vmatpush1.msra.mxu0 %v80
    %114 = vmatprep.subr.mxu0 %v83
    %115 = vmatpush1.msra.mxu0 %v82
    %116 = vmatprep.subr.mxu0 %v85
    %117 = vmatpush1.msra.mxu0 %v84
    %118 = vmatprep.subr.mxu0 %v87
    %119 = vmatpush1.msra.mxu0 %v86
    %120 = vmatprep.subr.mxu0 %v89
    %121 = vmatpush1.msra.mxu0 %v88
    %122 = vmatprep.subr.mxu0 %v91
    %123 = vmatpush1.msra.mxu0 %v90
    %124 = vmatprep.subr.mxu0 %v93
    %125 = vmatpush1.msra.mxu0 %v92
    %126 = vmatprep.subr.mxu0 %v95
    %127 = vmatpush1.msra.mxu0 %v94
    %128 = vmatprep.subr.mxu0 0.0
    %129 = vmatpush1.msra.mxu0 0.0
    %130 = vmatprep.subr.mxu0 0.0
    %131 = vmatpush1.msra.mxu0 0.0
    %132 = vmatprep.subr.mxu0 0.0
    %133 = vmatpush1.msra.mxu0 0.0
    %134 = vmatprep.subr.mxu0 0.0
    %135 = vmatpush1.msra.mxu0 0.0
    %136 = vmatprep.subr.mxu0 0.0
    %137 = vmatpush1.msra.mxu0 0.0
    %138 = vmatprep.subr.mxu0 0.0
    %139 = vmatpush1.msra.mxu0 0.0
    %140 = vmatprep.subr.mxu0 0.0
    %141 = vmatpush1.msra.mxu0 0.0
    %142 = vmatprep.subr.mxu0 0.0
    %143 = vmatpush1.msra.mxu0 0.0
    %144 = vmatprep.subr.mxu0 0.0
    %145 = vmatpush1.msra.mxu0 0.0
    %146 = vmatprep.subr.mxu0 0.0
    %147 = vmatpush1.msra.mxu0 0.0
    %148 = vmatprep.subr.mxu0 0.0
    %149 = vmatpush1.msra.mxu0 0.0
    %150 = vmatprep.subr.mxu0 0.0
    %151 = vmatpush1.msra.mxu0 0.0
    %152 = vmatprep.subr.mxu0 0.0
    %153 = vmatpush1.msra.mxu0 0.0
    %154 = vmatprep.subr.mxu0 0.0
    %155 = vmatpush1.msra.mxu0 0.0
    %156 = vmatprep.subr.mxu0 0.0
    %157 = vmatpush1.msra.mxu0 0.0
    %158 = vmatprep.subr.mxu0 0.0
    %159 = vmatpush1.msra.mxu0 0.0
    %160 = vmatprep.mubr.f32.mxu0 0.0
    %161 = vmatmul.mubr.f32.gmra.mrb[0].mxu0 %v62
    %v162 = vpop.f32.mrb[0].mxu0
    %v163 = vadd.f32 0.0, %v162
    %v164 = vpop.f32.mrb[0].mxu0
    %v165 = vadd.f32 0.0, %v164
    %166 = vmatprep.mubr.f32.mxu0 0.0
    %167 = vmatmul.mubr.f32.gmra.mrb[0].mxu0 %v63
    %v168 = vpop.f32.mrb[0].mxu0
    %v169 = vadd.f32 0.0, %v168
    %v170 = vpop.f32.mrb[0].mxu0
    %v171 = vadd.f32 0.0, %v170
    %172 = vdwg.mxu0
    %v173 = vmax.f32 %v163, 0.0
    %v174 = vmax.f32 %v165, 0.0
    %v175 = vmax.f32 %v169, 0.0
    %v176 = vmax.f32 %v171, 0.0
    %v177 = vld [vmem:[#allocation7] sm:$0xff]
    %v178 = vld [vmem:[#allocation7 + $0x8] sm:$0xff]
    %v179 = vld [vmem:[#allocation7 + $0x10] sm:$0xff]
    %v180 = vld [vmem:[#allocation7 + $0x18] sm:$0xff]
    %v181 = vld [vmem:[#allocation7 + $0x20] sm:$0xff]
    %v182 = vld [vmem:[#allocation7 + $0x28] sm:$0xff]
    %v183 = vld [vmem:[#allocation7 + $0x30] sm:$0xff]
    %v184 = vld [vmem:[#allocation7 + $0x38] sm:$0xff]
    %v185 = vld [vmem:[#allocation7 + $0x40] sm:$0xff]
    %v186 = vld [vmem:[#allocation7 + $0x48] sm:$0xff]
    %v187 = vld [vmem:[#allocation7 + $0x50] sm:$0xff]
    %v188 = vld [vmem:[#allocation7 + $0x58] sm:$0xff]
    %v189 = vld [vmem:[#allocation7 + $0x60] sm:$0xff]
    %v190 = vld [vmem:[#allocation7 + $0x68] sm:$0xff]
    %v191 = vld [vmem:[#allocation7 + $0x70] sm:$0xff]
    %v192 = vld [vmem:[#allocation7 + $0x78] sm:$0xff]
    %v193 = vld [vmem:[#allocation7 + $0x80] sm:$0xff]
    %v194 = vld [vmem:[#allocation7 + $0x88] sm:$0xff]
    %v195 = vld [vmem:[#allocation7 + $0x90] sm:$0xff]
    %v196 = vld [vmem:[#allocation7 + $0x98] sm:$0xff]
    %v197 = vld [vmem:[#allocation7 + $0xa0] sm:$0xff]
    %v198 = vld [vmem:[#allocation7 + $0xa8] sm:$0xff]
    %v199 = vld [vmem:[#allocation7 + $0xb0] sm:$0xff]
    %v200 = vld [vmem:[#allocation7 + $0xb8] sm:$0xff]
    %v201 = vld [vmem:[#allocation7 + $0xc0] sm:$0xff]
    %v202 = vld [vmem:[#allocation7 + $0xc8] sm:$0xff]
    %v203 = vld [vmem:[#allocation7 + $0xd0] sm:$0xff]
    %v204 = vld [vmem:[#allocation7 + $0xd8] sm:$0xff]
    %v205 = vld [vmem:[#allocation7 + $0xe0] sm:$0xff]
    %v206 = vld [vmem:[#allocation7 + $0xe8] sm:$0xff]
    %v207 = vld [vmem:[#allocation7 + $0xf0] sm:$0xff]
    %v208 = vld [vmem:[#allocation7 + $0xf8] sm:$0xff]
    %209 = vmatprep.subr.mxu0 0.0
    %210 = vmatpush1.msra.mxu0 %v177
    %211 = vmatprep.subr.mxu0 0.0
    %212 = vmatpush1.msra.mxu0 %v178
    %213 = vmatprep.subr.mxu0 0.0
    %214 = vmatpush1.msra.mxu0 %v179
    %215 = vmatprep.subr.mxu0 0.0
    %216 = vmatpush1.msra.mxu0 %v180
    %217 = vmatprep.subr.mxu0 0.0
    %218 = vmatpush1.msra.mxu0 %v181
    %219 = vmatprep.subr.mxu0 0.0
    %220 = vmatpush1.msra.mxu0 %v182
    %221 = vmatprep.subr.mxu0 0.0
    %222 = vmatpush1.msra.mxu0 %v183
    %223 = vmatprep.subr.mxu0 0.0
    %224 = vmatpush1.msra.mxu0 %v184
    %225 = vmatprep.subr.mxu0 0.0
    %226 = vmatpush1.msra.mxu0 %v185
    %227 = vmatprep.subr.mxu0 0.0
    %228 = vmatpush1.msra.mxu0 %v186
    %229 = vmatprep.subr.mxu0 0.0
    %230 = vmatpush1.msra.mxu0 %v187
    %231 = vmatprep.subr.mxu0 0.0
    %232 = vmatpush1.msra.mxu0 %v188
    %233 = vmatprep.subr.mxu0 0.0
    %234 = vmatpush1.msra.mxu0 %v189
    %235 = vmatprep.subr.mxu0 0.0
    %236 = vmatpush1.msra.mxu0 %v190
    %237 = vmatprep.subr.mxu0 0.0
    %238 = vmatpush1.msra.mxu0 %v191
    %239 = vmatprep.subr.mxu0 0.0
    %240 = vmatpush1.msra.mxu0 %v192
    %241 = vmatprep.subr.mxu0 0.0
    %242 = vmatpush1.msra.mxu0 %v193
    %243 = vmatprep.subr.mxu0 0.0
    %244 = vmatpush1.msra.mxu0 %v194
    %245 = vmatprep.subr.mxu0 0.0
    %246 = vmatpush1.msra.mxu0 %v195
    %247 = vmatprep.subr.mxu0 0.0
    %248 = vmatpush1.msra.mxu0 %v196
    %249 = vmatprep.subr.mxu0 0.0
    %250 = vmatpush1.msra.mxu0 %v197
    %251 = vmatprep.subr.mxu0 0.0
    %252 = vmatpush1.msra.mxu0 %v198
    %253 = vmatprep.subr.mxu0 0.0
    %254 = vmatpush1.msra.mxu0 %v199
    %255 = vmatprep.subr.mxu0 0.0
    %256 = vmatpush1.msra.mxu0 %v200
    %257 = vmatprep.subr.mxu0 0.0
    %258 = vmatpush1.msra.mxu0 %v201
    %259 = vmatprep.subr.mxu0 0.0
    %260 = vmatpush1.msra.mxu0 %v202
    %261 = vmatprep.subr.mxu0 0.0
    %262 = vmatpush1.msra.mxu0 %v203
    %263 = vmatprep.subr.mxu0 0.0
    %264 = vmatpush1.msra.mxu0 %v204
    %265 = vmatprep.subr.mxu0 0.0
    %266 = vmatpush1.msra.mxu0 %v205
    %267 = vmatprep.subr.mxu0 0.0
    %268 = vmatpush1.msra.mxu0 %v206
    %269 = vmatprep.subr.mxu0 0.0
    %270 = vmatpush1.msra.mxu0 %v207
    %271 = vmatprep.subr.mxu0 0.0
    %272 = vmatpush1.msra.mxu0 %v208
    %273 = vmatprep.mubr.f32.mxu0 %v174
    %274 = vmatmul.mubr.f32.gmra.mrb[0].mxu0 %v173
    %v275 = vpop.f32.mrb[0].mxu0
    %v276 = vadd.f32 %v62, %v275
    %v277 = vpop.f32.mrb[0].mxu0
    %278 = vmatprep.mubr.f32.mxu0 %v176
    %279 = vmatmul.mubr.f32.gmra.mrb[0].mxu0 %v175
    %v280 = vpop.f32.mrb[0].mxu0
    %v281 = vadd.f32 %v63, %v280
    %v282 = vpop.f32.mrb[0].mxu0
    %283 = vdwg.mxu0
    %284 = vadd.xlane.f32.xlu0 %v276
    %v285 = vpop.xlane.xlu0 %284
    %286 = vadd.xlane.f32.xlu0 %v281
    %v287 = vpop.xlane.xlu0 %286
    %v288 = vrcp.pop 128.0
    %v289 = vmul.f32 %v285, %v288
    %v290 = vmul.f32 %v287, %v288
    %v291 = vsub.f32 %v276, %v289
    %v292 = vsub.f32 %v281, %v290
    %v293 = vmul.f32 %v291, %v291
    %v294 = vmul.f32 %v292, %v292
    %295 = vadd.xlane.f32.xlu0 %v293
    %v296 = vpop.xlane.xlu0 %295
    %297 = vadd.xlane.f32.xlu0 %v294
    %v298 = vpop.xlane.xlu0 %297
    %v299 = vmul.f32 %v296, %v288
    %v300 = vmul.f32 %v298, %v288
    %v301 = vadd.f32 %v299, 1e-05
    %v302 = vadd.f32 %v300, 1e-05
    %v303 = vrsqrt.pop %v301
    %v304 = vrsqrt.pop %v302
    %v305 = vmul.f32 %v291, %v303
    %v306 = vmul.f32 %v292, %v304
    %v307 = vld [vmem:[%s3] sm:$0x1]
    %v309 = vlaneseq
    %v310 = vshrl.u32 %v309, 7
    %v311 = vsub.s32 0, %v310
    %v312 = vrot.slane %v307, %v311
    %v314 = vmul.f32 %v305, %v312
    %v315 = vmul.f32 %v306, %v312
    %v316 = vld [vmem:[%s4] sm:$0x1]
    %v318 = vlaneseq
    %v319 = vshrl.u32 %v318, 7
    %v320 = vsub.s32 0, %v319
    %v321 = vrot.slane %v316, %v320
    %v323 = vadd.f32 %v314, %v321
    %v324 = vadd.f32 %v315, %v321
    %325 = vst [vmem:[#allocation8] sm:$0xff] %v323
    %326 = vst [vmem:[#allocation8 + $0x8] sm:$0xff] %v324
    // Predicated region
    $region34: #{tpu_custom_call.1} parent=1 // pred_check
      _
    $region35: #{tpu_custom_call.1} parent=1 // pred_check_branch
      %328 = sbr.rel (0) target = $region37
    $region36: #{tpu_custom_call.1} parent=1 // pred_region
      %s330 = ssub.s32 256, 256
      %331 = vsyncadd [#allocation4], %s330
      %s332 = sshll.u32 [#allocation8], 4
      %s333 = int_to_ptr.vmem [resolvable:$true] %s332
      %338 = dma.vmem_to_hbm [thread:$0]  %s333, 256, %s5, [#allocation4], 128, 128, 8
    $region37: #{tpu_custom_call.1} parent=1 // pred_fallthru
      _
    // Predicated region
    $region38: #{tpu_custom_call.1} parent=1 // pred_check
      _
    $region39: #{tpu_custom_call.1} parent=1 // pred_check_branch
      %340 = sbr.rel (0) target = $region41
    $region40: #{tpu_custom_call.1} parent=1 // pred_region
      %341 = dma.done [#allocation4], 256
    $region41: #{tpu_custom_call.1} parent=1 // pred_fallthru
      _
    %342 = vsyncpa [#allocation3], 1
    %343 = vsyncpa [#allocation6], 1
    %344 = vsyncpa [#allocation4], 1

</llo_original>
